<compile_context>
chip_gen: v7x
topology: tpu7x:2x2x1
jax: 0.10.0
libtpu: 0.0.40
codegen_flags: <defaults>
</compile_context>

<pallas_src>
import functools
import math

import jax
import jax.numpy as jnp
from jax.experimental import pallas as pl
from jax.experimental.pallas import tpu as pltpu


# ----------------------------------------------------------------------------
# Kernel bodies. Grid = (i over M tiles, j over N tiles). h cached across j.
# ----------------------------------------------------------------------------
def _cola_kernel_resident(x_ref, a_ref, b_ref, bias_ref, o_ref, h_ref):
    """cola_b / bias fully resident in VMEM: (num_j, rank_pad, tn) / (num_j, 1, tn)."""
    j = pl.program_id(1)

    @pl.when(j == 0)
    def _():
        h = jnp.dot(x_ref[...], a_ref[...], preferred_element_type=jnp.float32)
        h_ref[...] = h * jax.nn.sigmoid(h)          # silu in f32 (EUP + VPU)

    b = b_ref[j]                                    # (rank_pad, tn) slab, no DMA
    out = jnp.dot(h_ref[...].astype(b.dtype), b, preferred_element_type=jnp.float32)
    o_ref[...] = (out + bias_ref[j]).astype(o_ref.dtype)


def _cola_kernel_tiled(x_ref, a_ref, b_ref, bias_ref, o_ref, h_ref):
    """cola_b / bias delivered per grid step by the pipeline (fallback path)."""
    @pl.when(pl.program_id(1) == 0)
    def _():
        h = jnp.dot(x_ref[...], a_ref[...], preferred_element_type=jnp.float32)
        h_ref[...] = h * jax.nn.sigmoid(h)

    b = b_ref[...]
    out = jnp.dot(h_ref[...].astype(b.dtype), b, preferred_element_type=jnp.float32)
    o_ref[...] = (out + bias_ref[...]).astype(o_ref.dtype)


# ----------------------------------------------------------------------------
# Trace-time tiling helpers.
# ----------------------------------------------------------------------------
def _round_up(x, m):
    return ((x + m - 1) // m) * m


def _vmem_capacity_bytes():
    """Physical VMEM of the current chip; conservative 64 MiB fallback (v7x)."""
    try:
        cap = int(pltpu.get_tpu_info().vmem_capacity_bytes)
        if cap > 0:
            return cap
    except Exception:
        pass
    return 64 * 1024 * 1024


def _pick_tn(out_pad, max_tn=2048):
    """N tile width. out_pad is always a multiple of 128."""
    if out_pad <= max_tn:
        return out_pad
    for tn in (2048, 1024, 512, 256, 128):
        if out_pad % tn == 0:
            return tn
    return 128


def _pick_tm(M, per_tm_bytes, budget, sub):
    """Largest M tile (multiple of the dtype sublane packing) fitting the budget."""
    cap = _round_up(max(M, 1), sub)
    cands = [c for c in (1024, 768, 512, 384, 256, 192, 128, 96, 64, 32, 16, 8)
             if c % sub == 0 and c <= cap]
    if cap <= 1024 and cap not in cands:
        cands.append(cap)
    cands = sorted(set(cands), reverse=True)
    for tm in cands:
        if per_tm_bytes(tm) <= budget:
            return tm
    return cands[-1]


# ----------------------------------------------------------------------------
# Public wrapper.
# ----------------------------------------------------------------------------
@jax.jit
def cola_forward(x, cola_a, cola_b, bias=None):
    """x: (..., in_features) -> (..., out_features). Matches ColaLayer.forward."""
    lead = x.shape[:-1]
    in_features = x.shape[-1]
    rank, out_features = cola_b.shape
    M = int(math.prod(lead)) if lead else 1
    dtype = x.dtype
    itemsize = jnp.dtype(dtype).itemsize
    sub = max(8, 32 // itemsize)                  # sublane packing multiple

    # --- parameter prep (cheap: weights are low-rank) ------------------------
    # rank: pad to the sublane multiple only (exact: silu(0)=0, zero B rows add 0).
    rank_pad = _round_up(rank, sub)
    if rank_pad != rank:
        cola_a = jnp.pad(cola_a, ((0, 0), (0, rank_pad - rank)))
        cola_b = jnp.pad(cola_b, ((0, rank_pad - rank), (0, 0)))
    # out_features: pad to 128 for lane-dense stores + N tiling; sliced off after.
    out_pad = _round_up(out_features, 128)
    if out_pad != out_features:
        cola_b = jnp.pad(cola_b, ((0, 0), (0, out_pad - out_features)))
    a = cola_a.astype(dtype)
    b = cola_b.astype(dtype)
    if bias is None:
        bias_f = jnp.zeros((out_pad,), jnp.float32)
    else:
        bias_f = bias.astype(jnp.float32)
        if out_pad != out_features:
            bias_f = jnp.pad(bias_f, (0, out_pad - out_features))

    x2 = x.reshape(M, in_features)

    # --- generation-aware tile selection --------------------------------------
    cap = _vmem_capacity_bytes()
    soft = int(cap * 0.75)
    tn = _pick_tn(out_pad)
    num_j = out_pad // tn

    b_bytes = rank_pad * out_pad * itemsize
    bias_bytes = out_pad * 4
    # Keep B/bias fully resident only when N is actually tiled and they are small.
    b_resident = (num_j > 1) and (2 * (b_bytes + bias_bytes) <= soft // 4)

    a_fixed = 2 * in_features * rank_pad * itemsize
    if b_resident or num_j == 1:
        fixed = a_fixed + 2 * (b_bytes + bias_bytes)
    else:
        fixed = a_fixed + 2 * (rank_pad * tn * itemsize + tn * 4)

    def per_tm(tm):
        return (2 * tm * in_features * itemsize      # x tile, double-buffered
                + 2 * tm * tn * itemsize             # out tile, double-buffered
                + 2 * tm * rank_pad * 4              # h scratch + f32 temp
                + tm * tn * 4)                       # f32 output accumulator

    budget = soft - fixed - (4 << 20)
    tm = _pick_tm(M, per_tm, budget, sub)
    grid = (pl.cdiv(M, tm), num_j)                   # ragged M: boundary block masked

    # --- specs ----------------------------------------------------------------
    x_spec = pl.BlockSpec((tm, in_features), lambda i, j: (i, 0))
    a_spec = pl.BlockSpec((in_features, rank_pad), lambda i, j: (0, 0))
    if b_resident:
        kernel = _cola_kernel_resident
        # (rank_pad, out_pad) -> (num_j, rank_pad, tn): resident, indexed by j in-kernel.
        b_in = b.reshape(rank_pad, num_j, tn).transpose(1, 0, 2)
        bias_in = bias_f.reshape(num_j, 1, tn)
        b_spec = pl.BlockSpec((num_j, rank_pad, tn), lambda i, j: (0, 0, 0))
        bias_spec = pl.BlockSpec((num_j, 1, tn), lambda i, j: (0, 0, 0))
    else:
        kernel = _cola_kernel_tiled
        b_in = b
        bias_in = bias_f.reshape(1, out_pad)
        b_spec = pl.BlockSpec((rank_pad, tn), lambda i, j: (0, j))
        bias_spec = pl.BlockSpec((1, tn), lambda i, j: (0, j))

    need = fixed + per_tm(tm)
    vmem_limit = int(min(cap, max(need + (16 << 20), 32 << 20)))

    out2 = pl.pallas_call(
        kernel,
        out_shape=jax.ShapeDtypeStruct((M, out_pad), dtype),
        grid_spec=pltpu.PrefetchScalarGridSpec(
            num_scalar_prefetch=0,
            grid=grid,
            in_specs=[x_spec, a_spec, b_spec, bias_spec],
            out_specs=pl.BlockSpec((tm, tn), lambda i, j: (i, j)),
            scratch_shapes=[pltpu.VMEM((tm, rank_pad), jnp.float32)],
        ),
        compiler_params=pltpu.CompilerParams(
            dimension_semantics=("parallel", "arbitrary"),
            vmem_limit_bytes=vmem_limit,
        ),
    )(x2, a, b_in, bias_in)

    if out_pad != out_features:
        out2 = out2[:, :out_features]
    return out2.reshape(*lead, out_features)


# ----------------------------------------------------------------------------
# Parameter init matching the PyTorch __init__ recipe + pure-JAX reference.
# ----------------------------------------------------------------------------
def init_cola_params(key, in_features, out_features, rank, dtype=jnp.float32):
    k_a, k_b, k_bias = jax.random.split(key, 3)
    target_sdv = (in_features + out_features) ** (-0.5)
    scale = (rank ** (-0.25)) * (target_sdv ** 0.5)
    cola_a = jax.random.normal(k_a, (in_features, rank), dtype) * scale
    cola_b = jax.random.normal(k_b, (rank, out_features), dtype) * scale
    stdv = 1.0 / out_features ** 0.5
    bias = jax.random.uniform(k_bias, (out_features,), dtype, minval=-stdv, maxval=stdv)
    return cola_a, cola_b, bias


def _reference(x, cola_a, cola_b, bias):
    h = jnp.matmul(x, cola_a, precision="highest")
    h = h * jax.nn.sigmoid(h)
    return jnp.matmul(h, cola_b, precision="highest") + bias


if __name__ == "__main__":
    # 1) Small shapes consistent with the module: batch=2, seq=8, hidden=32, rank=8.
    B, S = 2, 8
    in_features, out_features, rank = 32, 32, 8
    key = jax.random.PRNGKey(0)
    k_x, k_p = jax.random.split(key)
    x = jax.random.normal(k_x, (B, S, in_features), jnp.float32)
    cola_a, cola_b, bias = init_cola_params(k_p, in_features, out_features, rank)
    out = jax.block_until_ready(cola_forward(x, cola_a, cola_b, bias))
    ref = _reference(x, cola_a, cola_b, bias)
    assert out.shape == (B, S, out_features)
    assert jnp.allclose(out, ref, atol=1e-5, rtol=1e-5), "mismatch vs reference"

    # 2) Ragged M + odd dims: exercises boundary-block masking and out_features pad.
    B2, S2, in2, out2f, r2 = 2, 37, 48, 96, 4
    k_x2, k_p2 = jax.random.split(jax.random.PRNGKey(1))
    x2 = jax.random.normal(k_x2, (B2, S2, in2), jnp.float32)
    a2, b2, bias2_ = init_cola_params(k_p2, in2, out2f, r2)
    o2 = jax.block_until_ready(cola_forward(x2, a2, b2, bias2_))
    assert o2.shape == (B2, S2, out2f)
    assert jnp.allclose(o2, _reference(x2, a2, b2, bias2_), atol=1e-5, rtol=1e-5), \
        "ragged mismatch"

    # 3) Wide output: exercises N tiling, resident B indexed by program_id(1),
    #    and the h-scratch reuse across N tiles.
    B3, S3, in3, out3f, r3 = 2, 16, 64, 2304, 8
    k_x3, k_p3 = jax.random.split(jax.random.PRNGKey(2))
    x3 = jax.random.normal(k_x3, (B3, S3, in3), jnp.float32)
    a3, b3, bias3_ = init_cola_params(k_p3, in3, out3f, r3)
    o3 = jax.block_until_ready(cola_forward(x3, a3, b3, bias3_))
    assert o3.shape == (B3, S3, out3f)
    assert jnp.allclose(o3, _reference(x3, a3, b3, bias3_), atol=1e-5, rtol=1e-5), \
        "wide-output mismatch"

    print("KERNEL_OK")
</pallas_src>

<mosaic_0001>
module attributes {stable_mosaic.version = 11 : i64} {
  func.func @_cola_kernel_tiled(%arg0: i32, %arg1: i32, %arg2: memref<16x32xf32, #tpu.memory_space<vmem>>, %arg3: memref<32x8xf32, #tpu.memory_space<vmem>>, %arg4: memref<8x128xf32, #tpu.memory_space<vmem>>, %arg5: memref<1x128xf32, #tpu.memory_space<vmem>>, %arg6: memref<16x128xf32, #tpu.memory_space<vmem>>, %arg7: memref<16x8xf32, #tpu.memory_space<vmem>>) attributes {dimension_semantics = [#tpu.dimension_semantics<parallel>, #tpu.dimension_semantics<arbitrary>], iteration_bounds = array<i64: 1, 1>, scalar_prefetch = 0 : i64, scratch_operands = 1 : i64, tpu.core_type = #tpu.core_type<tc>, window_params = [{transform_indices = @transform_0, window_bounds = array<i64: 16, 32>}, {pipeline_mode = #tpu.pipeline_mode<synchronous>, transform_indices = @transform_1, window_bounds = array<i64: 32, 8>}, {transform_indices = @transform_2, window_bounds = array<i64: 8, 128>}, {transform_indices = @transform_3, window_bounds = array<i64: 1, 128>}, {transform_indices = @transform_4, window_bounds = array<i64: 16, 128>}]} {
    %c0_i32 = arith.constant 0 : i32
    %0 = arith.cmpi eq, %arg1, %c0_i32 : i32
    %1 = arith.extui %0 : i1 to i32
    %c0_i32_0 = arith.constant 0 : i32
    %2 = arith.cmpi ne, %1, %c0_i32_0 : i32
    scf.if %2 {
      %c0_8 = arith.constant 0 : index
      %c0_9 = arith.constant 0 : index
      %10 = vector.load %arg2[%c0_8, %c0_9] : memref<16x32xf32, #tpu.memory_space<vmem>>, vector<16x32xf32>
      %c0_10 = arith.constant 0 : index
      %c0_11 = arith.constant 0 : index
      %11 = vector.load %arg3[%c0_10, %c0_11] : memref<32x8xf32, #tpu.memory_space<vmem>>, vector<32x8xf32>
      %cst_12 = arith.constant dense<0.000000e+00> : vector<16x8xf32>
      %12 = tpu.matmul %10, %11, %cst_12 {dimension_numbers = #tpu.dot_dimension_numbers<[1], [0], [0], [1], [0, 0, 1, 1], [], []>} : vector<16x32xf32>, vector<32x8xf32>, vector<16x8xf32> -> vector<16x8xf32>
      %13 = arith.negf %12 : vector<16x8xf32>
      %14 = math.exp %13 : vector<16x8xf32>
      %cst_13 = arith.constant 1.000000e+00 : f32
      %15 = vector.broadcast %cst_13 : f32 to vector<16x8xf32>
      %16 = arith.addf %15, %14 : vector<16x8xf32>
      %17 = arith.divf %15, %16 : vector<16x8xf32>
      %18 = arith.mulf %12, %17 : vector<16x8xf32>
      %c0_14 = arith.constant 0 : index
      %c0_15 = arith.constant 0 : index
      %19 = vector.load %arg7[%c0_14, %c0_15] : memref<16x8xf32, #tpu.memory_space<vmem>>, vector<16x8xf32>
      tpu.vector_store %arg7[%c0_14, %c0_15], %18 {strides = array<i32>} : memref<16x8xf32, #tpu.memory_space<vmem>>, vector<16x8xf32>,
    } else {
    }
    %c0 = arith.constant 0 : index
    %c0_1 = arith.constant 0 : index
    %3 = vector.load %arg4[%c0, %c0_1] : memref<8x128xf32, #tpu.memory_space<vmem>>, vector<8x128xf32>
    %c0_2 = arith.constant 0 : index
    %c0_3 = arith.constant 0 : index
    %4 = vector.load %arg7[%c0_2, %c0_3] : memref<16x8xf32, #tpu.memory_space<vmem>>, vector<16x8xf32>
    %cst = arith.constant dense<0.000000e+00> : vector<16x128xf32>
    %5 = tpu.matmul %4, %3, %cst {dimension_numbers = #tpu.dot_dimension_numbers<[1], [0], [0], [1], [0, 0, 1, 1], [], []>} : vector<16x8xf32>, vector<8x128xf32>, vector<16x128xf32> -> vector<16x128xf32>
    %c0_4 = arith.constant 0 : index
    %c0_5 = arith.constant 0 : index
    %6 = vector.load %arg5[%c0_4, %c0_5] : memref<1x128xf32, #tpu.memory_space<vmem>>, vector<1x128xf32>
    %7 = vector.broadcast %6 : vector<1x128xf32> to vector<16x128xf32>
    %8 = arith.addf %5, %7 : vector<16x128xf32>
    %c0_6 = arith.constant 0 : index
    %c0_7 = arith.constant 0 : index
    %9 = vector.load %arg6[%c0_6, %c0_7] : memref<16x128xf32, #tpu.memory_space<vmem>>, vector<16x128xf32>
    tpu.vector_store %arg6[%c0_6, %c0_7], %8 {strides = array<i32>} : memref<16x128xf32, #tpu.memory_space<vmem>>, vector<16x128xf32>,
    return
  }
  func.func @transform_0(%arg0: i32, %arg1: i32) -> (i32, i32) {
    %c0_i32 = arith.constant 0 : i32
    %c0_i32_0 = arith.constant 0 : i32
    return %arg0, %c0_i32 : i32, i32
  }
  func.func @transform_1(%arg0: i32, %arg1: i32) -> (i32, i32) {
    %c0_i32 = arith.constant 0 : i32
    %c0_i32_0 = arith.constant 0 : i32
    %c0_i32_1 = arith.constant 0 : i32
    return %c0_i32, %c0_i32_0 : i32, i32
  }
  func.func @transform_2(%arg0: i32, %arg1: i32) -> (i32, i32) {
    %c0_i32 = arith.constant 0 : i32
    %c0_i32_0 = arith.constant 0 : i32
    return %c0_i32, %arg1 : i32, i32
  }
  func.func @transform_3(%arg0: i32, %arg1: i32) -> (i32, i32) {
    %c0_i32 = arith.constant 0 : i32
    %c0_i32_0 = arith.constant 0 : i32
    return %c0_i32, %arg1 : i32, i32
  }
  func.func @transform_4(%arg0: i32, %arg1: i32) -> (i32, i32) {
    %c0_i32 = arith.constant 0 : i32
    return %arg0, %arg1 : i32, i32
  }
}

</mosaic_0001>

<llo_original>
// kernel: cola_forward.1
$region0: #{cola_forward.1}
  #allocation0 [shape = 'u32[]', space=smem, size = 0x4, offset = 0x4, fixed_abs, tag = 'smem constant byte address 0x4 - core index']
  #allocation1 [shape = 'u32[144,128]{1,0:T(1,128)}', space=vmem, size = 0x12000, scoped, tag = 'internal scratch']
  #allocation2 [shape = 'f32[16,8]{1,0:T(8,128)}', space=vmem, size = 0x2000, scoped, tag = 'scratch operand']
  %s0 = inlined_call_operand.vmem [shape: f32[16,32], index: 0, kind: input, shape index: {}]
  %s1 = inlined_call_operand.vmem [shape: f32[32,8], index: 1, kind: input, shape index: {}]
  %s2 = inlined_call_operand.vmem [shape: f32[8,128], index: 2, kind: input, shape index: {}]
  %s3 = inlined_call_operand.vmem [shape: f32[1,128], index: 3, kind: input, shape index: {}]
  %s4 = inlined_call_operand.vmem [shape: f32[16,128], index: 4, kind: output, shape index: {}]
  %s5 = sld [smem:[#allocation0]]
  $region30: #{cola_forward.1} parent=0
    _
  %s7 = ssub.s32 1, %s5
  %s8 = scalar_select 0, %s7, %s5
  // Predicated region
  $region2: #{cola_forward.1} parent=0 // pred_check
    _
  $region3: #{cola_forward.1} parent=0 // pred_check_branch
    %10 = sbr.rel (0) target = $region5
  $region4: #{cola_forward.1} parent=0 // pred_region
    _
  $region5: #{cola_forward.1} parent=0 // pred_fallthru
    _
  // Predicated region
  $region6: #{cola_forward.1} parent=0 // pred_check
    _
  $region7: #{cola_forward.1} parent=0 // pred_check_branch
    %12 = sbr.rel (0) target = $region9
  $region8: #{cola_forward.1} parent=0 // pred_region
    _
  $region9: #{cola_forward.1} parent=0 // pred_fallthru
    _
  // Predicated region
  $region10: #{cola_forward.1} parent=0 // pred_check
    _
  $region11: #{cola_forward.1} parent=0 // pred_check_branch
    %14 = sbr.rel (0) target = $region13
  $region12: #{cola_forward.1} parent=0 // pred_region
    _
  $region13: #{cola_forward.1} parent=0 // pred_fallthru
    _
  // Predicated region
  $region14: #{cola_forward.1} parent=0 // pred_check
    _
  $region15: #{cola_forward.1} parent=0 // pred_check_branch
    %16 = sbr.rel (0) target = $region17
  $region16: #{cola_forward.1} parent=0 // pred_region
    _
  $region17: #{cola_forward.1} parent=0 // pred_fallthru
    _
  %p17 = scmp.eq.s32.totalorder 0, 0
  // Predicated region
  $region18: #{cola_forward.1} parent=0 // pred_check
    %p18 = pneg %p17
  $region19: #{cola_forward.1} parent=0 // pred_check_branch
    %20 = sbr.rel (%p18) target = $region21
  $region20: #{cola_forward.1} parent=0 // pred_region
    %v21 = vld [vmem:[%s0] sm:$0xff]
    %v22 = vld [vmem:[%s0 + $0x8] sm:$0xff]
    %v23 = vld [vmem:[%s1] sm:$0xff]
    %v24 = vld [vmem:[%s1 + $0x8] sm:$0xff]
    %v25 = vld [vmem:[%s1 + $0x10] sm:$0xff]
    %v26 = vld [vmem:[%s1 + $0x18] sm:$0xff]
    %vm27 = vcmask 261120
    %v29 = vsel %vm27, %v21, 0
    %v32 = vsel %vm27, %v22, 0
    %34 = vmatprep.subr.mxu0 0.0
    %35 = vmatpush1.msra.mxu0 %v23
    %36 = vmatprep.subr.mxu0 0.0
    %37 = vmatpush1.msra.mxu0 %v24
    %38 = vmatprep.subr.mxu0 0.0
    %39 = vmatpush1.msra.mxu0 %v25
    %40 = vmatprep.subr.mxu0 0.0
    %41 = vmatpush1.msra.mxu0 %v26
    %42 = vmatprep.subr.mxu0 0.0
    %43 = vmatpush1.msra.mxu0 0.0
    %44 = vmatprep.subr.mxu0 0.0
    %45 = vmatpush1.msra.mxu0 0.0
    %46 = vmatprep.subr.mxu0 0.0
    %47 = vmatpush1.msra.mxu0 0.0
    %48 = vmatprep.subr.mxu0 0.0
    %49 = vmatpush1.msra.mxu0 0.0
    %50 = vmatprep.subr.mxu0 0.0
    %51 = vmatpush1.msra.mxu0 0.0
    %52 = vmatprep.subr.mxu0 0.0
    %53 = vmatpush1.msra.mxu0 0.0
    %54 = vmatprep.subr.mxu0 0.0
    %55 = vmatpush1.msra.mxu0 0.0
    %56 = vmatprep.subr.mxu0 0.0
    %57 = vmatpush1.msra.mxu0 0.0
    %58 = vmatprep.subr.mxu0 0.0
    %59 = vmatpush1.msra.mxu0 0.0
    %60 = vmatprep.subr.mxu0 0.0
    %61 = vmatpush1.msra.mxu0 0.0
    %62 = vmatprep.subr.mxu0 0.0
    %63 = vmatpush1.msra.mxu0 0.0
    %64 = vmatprep.subr.mxu0 0.0
    %65 = vmatpush1.msra.mxu0 0.0
    %66 = vmatprep.subr.mxu0 0.0
    %67 = vmatpush1.msra.mxu0 0.0
    %68 = vmatprep.subr.mxu0 0.0
    %69 = vmatpush1.msra.mxu0 0.0
    %70 = vmatprep.subr.mxu0 0.0
    %71 = vmatpush1.msra.mxu0 0.0
    %72 = vmatprep.subr.mxu0 0.0
    %73 = vmatpush1.msra.mxu0 0.0
    %74 = vmatprep.subr.mxu0 0.0
    %75 = vmatpush1.msra.mxu0 0.0
    %76 = vmatprep.subr.mxu0 0.0
    %77 = vmatpush1.msra.mxu0 0.0
    %78 = vmatprep.subr.mxu0 0.0
    %79 = vmatpush1.msra.mxu0 0.0
    %80 = vmatprep.subr.mxu0 0.0
    %81 = vmatpush1.msra.mxu0 0.0
    %82 = vmatprep.subr.mxu0 0.0
    %83 = vmatpush1.msra.mxu0 0.0
    %84 = vmatprep.subr.mxu0 0.0
    %85 = vmatpush1.msra.mxu0 0.0
    %86 = vmatprep.subr.mxu0 0.0
    %87 = vmatpush1.msra.mxu0 0.0
    %88 = vmatprep.subr.mxu0 0.0
    %89 = vmatpush1.msra.mxu0 0.0
    %90 = vmatprep.subr.mxu0 0.0
    %91 = vmatpush1.msra.mxu0 0.0
    %92 = vmatprep.subr.mxu0 0.0
    %93 = vmatpush1.msra.mxu0 0.0
    %94 = vmatprep.subr.mxu0 0.0
    %95 = vmatpush1.msra.mxu0 0.0
    %96 = vmatprep.subr.mxu0 0.0
    %97 = vmatpush1.msra.mxu0 0.0
    %98 = vmatprep.mubr.f32.mxu0 0.0
    %99 = vmatmul.mubr.f32.gmra.mrb[0].mxu0 %v29
    %v100 = vpop.f32.mrb[0].mxu0
    %v101 = vadd.f32 0.0, %v100
    %v102 = vpop.f32.mrb[0].mxu0
    %103 = vmatprep.mubr.f32.mxu0 0.0
    %104 = vmatmul.mubr.f32.gmra.mrb[0].mxu0 %v32
    %v105 = vpop.f32.mrb[0].mxu0
    %v106 = vadd.f32 0.0, %v105
    %v107 = vpop.f32.mrb[0].mxu0
    %108 = vdwg.mxu0
    %v109 = vxor.u32 %v101, 2147483648
    %v110 = vxor.u32 %v106, 2147483648
    %v111 = vmul.f32 %v109, 1.442695
    %v112 = vpow.pop %v111
    %v113 = vmul.f32 %v110, 1.442695
    %v114 = vpow.pop %v113
    %v115 = vadd.f32 %v112, 1.0
    %v116 = vadd.f32 %v114, 1.0
    %v117 = vrcp.pop %v115
    %v118 = vmul.f32 1.0, %v117
    %v119 = vrcp.pop %v116
    %v120 = vmul.f32 1.0, %v119
    %v121 = vmul.f32 %v101, %v118
    %v122 = vmul.f32 %v106, %v120
    %vm123 = vcmask 64512
    %124 = vst.msk [vmem:[#allocation2] sm:$0xff] %vm123, %v121
    %125 = vst.msk [vmem:[#allocation2 + $0x8] sm:$0xff] %vm123, %v122
  $region21: #{cola_forward.1} parent=0 // pred_fallthru
    _
  %v126 = vld [vmem:[%s2] sm:$0xff]
  %v127 = vld [vmem:[#allocation2] sm:$0xff]
  %v128 = vld [vmem:[#allocation2 + $0x8] sm:$0xff]
  %v129 = vld [vmem:[%s3] sm:$0x1]
  %v131 = vlaneseq
  %v132 = vshrl.u32 %v131, 7
  %v133 = vsub.s32 0, %v132
  %v134 = vrot.slane %v129, %v133
  %vm136 = vcmask 64512
  %v138 = vsel %vm136, %v127, 0
  %v141 = vsel %vm136, %v128, 0
  %143 = vmatprep.subr.mxu0 0.0
  %144 = vmatpush1.msra.mxu0 %v126
  %145 = vmatprep.subr.mxu0 0.0
  %146 = vmatpush1.msra.mxu0 0.0
  %147 = vmatprep.subr.mxu0 0.0
  %148 = vmatpush1.msra.mxu0 0.0
  %149 = vmatprep.subr.mxu0 0.0
  %150 = vmatpush1.msra.mxu0 0.0
  %151 = vmatprep.subr.mxu0 0.0
  %152 = vmatpush1.msra.mxu0 0.0
  %153 = vmatprep.subr.mxu0 0.0
  %154 = vmatpush1.msra.mxu0 0.0
  %155 = vmatprep.subr.mxu0 0.0
  %156 = vmatpush1.msra.mxu0 0.0
  %157 = vmatprep.subr.mxu0 0.0
  %158 = vmatpush1.msra.mxu0 0.0
  %159 = vmatprep.subr.mxu0 0.0
  %160 = vmatpush1.msra.mxu0 0.0
  %161 = vmatprep.subr.mxu0 0.0
  %162 = vmatpush1.msra.mxu0 0.0
  %163 = vmatprep.subr.mxu0 0.0
  %164 = vmatpush1.msra.mxu0 0.0
  %165 = vmatprep.subr.mxu0 0.0
  %166 = vmatpush1.msra.mxu0 0.0
  %167 = vmatprep.subr.mxu0 0.0
  %168 = vmatpush1.msra.mxu0 0.0
  %169 = vmatprep.subr.mxu0 0.0
  %170 = vmatpush1.msra.mxu0 0.0
  %171 = vmatprep.subr.mxu0 0.0
  %172 = vmatpush1.msra.mxu0 0.0
  %173 = vmatprep.subr.mxu0 0.0
  %174 = vmatpush1.msra.mxu0 0.0
  %175 = vmatprep.subr.mxu0 0.0
  %176 = vmatpush1.msra.mxu0 0.0
  %177 = vmatprep.subr.mxu0 0.0
  %178 = vmatpush1.msra.mxu0 0.0
  %179 = vmatprep.subr.mxu0 0.0
  %180 = vmatpush1.msra.mxu0 0.0
  %181 = vmatprep.subr.mxu0 0.0
  %182 = vmatpush1.msra.mxu0 0.0
  %183 = vmatprep.subr.mxu0 0.0
  %184 = vmatpush1.msra.mxu0 0.0
  %185 = vmatprep.subr.mxu0 0.0
  %186 = vmatpush1.msra.mxu0 0.0
  %187 = vmatprep.subr.mxu0 0.0
  %188 = vmatpush1.msra.mxu0 0.0
  %189 = vmatprep.subr.mxu0 0.0
  %190 = vmatpush1.msra.mxu0 0.0
  %191 = vmatprep.subr.mxu0 0.0
  %192 = vmatpush1.msra.mxu0 0.0
  %193 = vmatprep.subr.mxu0 0.0
  %194 = vmatpush1.msra.mxu0 0.0
  %195 = vmatprep.subr.mxu0 0.0
  %196 = vmatpush1.msra.mxu0 0.0
  %197 = vmatprep.subr.mxu0 0.0
  %198 = vmatpush1.msra.mxu0 0.0
  %199 = vmatprep.subr.mxu0 0.0
  %200 = vmatpush1.msra.mxu0 0.0
  %201 = vmatprep.subr.mxu0 0.0
  %202 = vmatpush1.msra.mxu0 0.0
  %203 = vmatprep.subr.mxu0 0.0
  %204 = vmatpush1.msra.mxu0 0.0
  %205 = vmatprep.subr.mxu0 0.0
  %206 = vmatpush1.msra.mxu0 0.0
  %207 = vmatprep.mubr.f32.mxu0 0.0
  %208 = vmatmul.mubr.f32.gmra.mrb[0].mxu0 %v138
  %v209 = vpop.f32.mrb[0].mxu0
  %v210 = vadd.f32 %v134, %v209
  %v211 = vpop.f32.mrb[0].mxu0
  %212 = vmatprep.mubr.f32.mxu0 0.0
  %213 = vmatmul.mubr.f32.gmra.mrb[0].mxu0 %v141
  %v214 = vpop.f32.mrb[0].mxu0
  %v215 = vadd.f32 %v134, %v214
  %v216 = vpop.f32.mrb[0].mxu0
  %217 = vdwg.mxu0
  %218 = vst [vmem:[%s4] sm:$0xff] %v210
  %219 = vst [vmem:[%s4 + $0x8] sm:$0xff] %v215
  // Predicated region
  $region22: #{cola_forward.1} parent=0 // pred_check
    _
  $region23: #{cola_forward.1} parent=0 // pred_check_branch
    %221 = sbr.rel (0) target = $region25
  $region24: #{cola_forward.1} parent=0 // pred_region
    _
  $region25: #{cola_forward.1} parent=0 // pred_fallthru
    _
  // Predicated region
  $region26: #{cola_forward.1} parent=0 // pred_check
    _
  $region27: #{cola_forward.1} parent=0 // pred_check_branch
    %223 = sbr.rel (0) target = $region29
  $region28: #{cola_forward.1} parent=0 // pred_region
    _
  $region29: #{cola_forward.1} parent=0 // pred_fallthru
    _

</llo_original>
